<compile_context>
chip_gen: v5e
topology: v5e:2x2
jax: 0.10.0
libtpu: 0.0.40
codegen_flags: <defaults>
</compile_context>

<pallas_src>
import functools

import jax
import jax.numpy as jnp
from jax.experimental import pallas as pl
from jax.experimental.pallas import tpu as pltpu

LANE = 128


def _round_up(x, m):
    return ((x + m - 1) // m) * m


def _rmse_partial_kernel(pred_ref, tgt_ref, out_ref, acc_ref, *,
                         inner_steps, block_rows, total_rows):
    c = pl.program_id(0)   # split / core index ("parallel")
    i = pl.program_id(1)   # reduction step within the split ("arbitrary")

    @pl.when(i == 0)
    def _():
        acc_ref[...] = jnp.zeros_like(acc_ref)

    # Logical (unclamped) block index -> global rows covered by this step.
    blk = c * inner_steps + i
    # Masking is only needed for the last partial block and for fully
    # out-of-range (clamped duplicate) blocks; everything else takes the
    # plain fast path (no iota / compare / select on the hot path).
    needs_mask = (blk + 1) * block_rows > total_rows

    @pl.when(jnp.logical_not(needs_mask))
    def _():
        d = pred_ref[...].astype(jnp.float32) - tgt_ref[...].astype(jnp.float32)
        # Sublane-aligned fold onto a single-vreg accumulator (pure VALU adds).
        acc_ref[...] += jnp.sum((d * d).reshape(-1, 8, LANE), axis=0)

    @pl.when(needs_mask)
    def _():
        row0 = blk * block_rows
        row_ids = row0 + jax.lax.broadcasted_iota(jnp.int32, (block_rows, LANE), 0)
        d = pred_ref[...].astype(jnp.float32) - tgt_ref[...].astype(jnp.float32)
        d = jnp.where(row_ids < total_rows, d, 0.0)
        acc_ref[...] += jnp.sum((d * d).reshape(-1, 8, LANE), axis=0)

    @pl.when(i == pl.num_programs(1) - 1)
    def _():
        out_ref[0, 0] = jnp.sum(acc_ref[...])   # one tiny (8,128) reduce / split


def _chip_kind():
    try:
        return jax.devices()[0].device_kind.lower()
    except Exception:
        return ""


def rmse_loss(pred, target, eps=1e-6):
    """sqrt(mean((pred - target)^2) + eps), matching fastphm RMSELoss.forward."""
    assert pred.shape == target.shape
    n_valid = pred.size

    p_flat = pred.reshape(-1)
    t_flat = target.reshape(-1)

    rem = n_valid % LANE
    aligned = n_valid - rem
    total_rows = aligned // LANE

    # Ragged (<128-element) tail: plain-JAX scalar work instead of padding
    # (a full-tensor jnp.pad would re-read+write both inputs through HBM).
    tail_sq = jnp.float32(0.0)
    if rem:
        dt = (p_flat[aligned:].astype(jnp.float32)
              - t_flat[aligned:].astype(jnp.float32))
        tail_sq = jnp.sum(dt * dt)

    if total_rows == 0:   # tiny input: no kernel needed
        mse = tail_sq / jnp.float32(n_valid)
        return jnp.sqrt(mse + jnp.float32(eps))

    # Lane-aligned prefix, free reshape for contiguous inputs, native dtype.
    p2 = p_flat[:aligned].reshape(total_rows, LANE)
    t2 = t_flat[:aligned].reshape(total_rows, LANE)

    # ---- generation-aware sizing -------------------------------------------
    kind = _chip_kind()
    is_v7 = ("v7" in kind) or ("7x" in kind)
    is_multi_tc = is_v7 or ("v4" in kind) or ("v5p" in kind)
    if is_v7:
        vmem_budget = 44 << 20            # v7x: 64 MiB physical / TC
    elif ("v2" in kind) or ("v3" in kind):
        vmem_budget = 12 << 20            # small-VMEM legacy chips
    else:
        vmem_budget = 64 << 20            # v5e / v6e: 128 MiB physical

    itemsize = max(p2.dtype.itemsize, t2.dtype.itemsize)
    sub = {4: 8, 2: 16, 1: 32}.get(itemsize, 8)   # respect packed sublane tiling
    max_rows = 16384 if is_v7 else 8192           # up to 8 MiB f32 per block
    block_rows = min(max_rows, _round_up(total_rows, sub))

    def _vmem_need(br):
        in_bytes = 2 * br * LANE * (p2.dtype.itemsize + t2.dtype.itemsize)
        tmp_bytes = 2 * br * LANE * 4     # headroom for f32 intermediates (d, d*d)
        return in_bytes + tmp_bytes + (2 << 20)

    while block_rows > sub and _vmem_need(block_rows) > vmem_budget:
        block_rows = max(sub, block_rows // 2)

    total_blocks = -(-total_rows // block_rows)
    num_splits = min(2 if is_multi_tc else 1, total_blocks)
    inner_steps = -(-total_blocks // num_splits)

    def in_map(c, i):
        blk = c * inner_steps + i
        # Clamp so the DMA never starts past the array; logically out-of-range
        # blocks are fully masked inside the kernel and contribute 0.
        return (jnp.minimum(blk, total_blocks - 1), 0)

    kernel = functools.partial(
        _rmse_partial_kernel,
        inner_steps=inner_steps,
        block_rows=block_rows,
        total_rows=total_rows,
    )

    partials = pl.pallas_call(
        kernel,
        out_shape=jax.ShapeDtypeStruct((num_splits, 1), jnp.float32),
        grid_spec=pltpu.PrefetchScalarGridSpec(
            num_scalar_prefetch=0,
            grid=(num_splits, inner_steps),
            in_specs=[
                pl.BlockSpec((block_rows, LANE), in_map),
                pl.BlockSpec((block_rows, LANE), in_map),
            ],
            out_specs=pl.BlockSpec(
                (1, 1), lambda c, i: (c, 0), memory_space=pltpu.SMEM
            ),
            scratch_shapes=[pltpu.VMEM((8, LANE), jnp.float32)],
        ),
        compiler_params=pltpu.CompilerParams(
            dimension_semantics=("parallel", "arbitrary"),
            vmem_limit_bytes=int(vmem_budget),
        ),
    )(p2, t2)

    # Combine per-core partial sums + ragged tail; scalar epilogue in XLA.
    mse = (jnp.sum(partials) + tail_sq) / jnp.float32(n_valid)
    return jnp.sqrt(mse + jnp.float32(eps))


if __name__ == "__main__":
    key = jax.random.PRNGKey(0)
    k1, k2, k3, k4 = jax.random.split(key, 4)

    # RMSE is shape-agnostic; small NCHW-like tensor (lane-aligned case).
    shape = (2, 4, 16, 16)
    pred = jax.random.normal(k1, shape, dtype=jnp.float32)
    target = jax.random.normal(k2, shape, dtype=jnp.float32)

    loss = rmse_loss(pred, target, eps=1e-6)
    jax.block_until_ready(loss)
    ref = jnp.sqrt(jnp.mean((pred - target) ** 2) + 1e-6)
    assert jnp.allclose(loss, ref, rtol=1e-5, atol=1e-6), (loss, ref)

    # Ragged / non-128-aligned case (exercises masked path + JAX tail).
    shape2 = (5, 100)
    pred2 = jax.random.normal(k3, shape2, dtype=jnp.float32)
    target2 = jax.random.normal(k4, shape2, dtype=jnp.float32)
    loss2 = rmse_loss(pred2, target2, eps=1e-6)
    jax.block_until_ready(loss2)
    ref2 = jnp.sqrt(jnp.mean((pred2 - target2) ** 2) + 1e-6)
    assert jnp.allclose(loss2, ref2, rtol=1e-5, atol=1e-6), (loss2, ref2)

    print("KERNEL_OK")
</pallas_src>

<mosaic_0001>
module attributes {stable_mosaic.version = 11 : i64} {
  func.func @_rmse_partial_kernel(%arg0: i32, %arg1: i32, %arg2: memref<16x128xf32, #tpu.memory_space<vmem>>, %arg3: memref<16x128xf32, #tpu.memory_space<vmem>>, %arg4: memref<1x1xf32, #tpu.memory_space<smem>>, %arg5: memref<8x128xf32, #tpu.memory_space<vmem>>) attributes {dimension_semantics = [#tpu.dimension_semantics<parallel>, #tpu.dimension_semantics<arbitrary>], iteration_bounds = array<i64: 1, 1>, scalar_prefetch = 0 : i64, scratch_operands = 1 : i64, tpu.core_type = #tpu.core_type<tc>, window_params = [{transform_indices = @transform_0, window_bounds = array<i64: 16, 128>}, {transform_indices = @transform_1, window_bounds = array<i64: 16, 128>}, {transform_indices = @transform_2, window_bounds = array<i64: 1, 1>}]} {
    %c0_i32 = arith.constant 0 : i32
    %0 = arith.cmpi eq, %arg1, %c0_i32 : i32
    %1 = arith.extui %0 : i1 to i32
    %c0_i32_0 = arith.constant 0 : i32
    %2 = arith.cmpi ne, %1, %c0_i32_0 : i32
    scf.if %2 {
      %cst = arith.constant 0.000000e+00 : f32
      %16 = vector.broadcast %cst : f32 to vector<8x128xf32>
      %c0 = arith.constant 0 : index
      %c0_7 = arith.constant 0 : index
      %17 = vector.load %arg5[%c0, %c0_7] : memref<8x128xf32, #tpu.memory_space<vmem>>, vector<8x128xf32>
      tpu.vector_store %arg5[%c0, %c0_7], %16 {strides = array<i32>} : memref<8x128xf32, #tpu.memory_space<vmem>>, vector<8x128xf32>,
    } else {
    }
    %c1_i32 = arith.constant 1 : i32
    %3 = arith.muli %arg0, %c1_i32 : i32
    %4 = arith.addi %3, %arg1 : i32
    %c1_i32_1 = arith.constant 1 : i32
    %5 = arith.addi %4, %c1_i32_1 : i32
    %c16_i32 = arith.constant 16 : i32
    %6 = arith.muli %5, %c16_i32 : i32
    %c16_i32_2 = arith.constant 16 : i32
    %7 = arith.cmpi sgt, %6, %c16_i32_2 : i32
    %true = arith.constant true
    %8 = arith.xori %7, %true : i1
    %9 = arith.extui %8 : i1 to i32
    %c0_i32_3 = arith.constant 0 : i32
    %10 = arith.cmpi ne, %9, %c0_i32_3 : i32
    scf.if %10 {
      %c0 = arith.constant 0 : index
      %c0_7 = arith.constant 0 : index
      %16 = vector.load %arg2[%c0, %c0_7] : memref<16x128xf32, #tpu.memory_space<vmem>>, vector<16x128xf32>
      %c0_8 = arith.constant 0 : index
      %c0_9 = arith.constant 0 : index
      %17 = vector.load %arg3[%c0_8, %c0_9] : memref<16x128xf32, #tpu.memory_space<vmem>>, vector<16x128xf32>
      %18 = arith.subf %16, %17 : vector<16x128xf32>
      %c0_10 = arith.constant 0 : index
      %c0_11 = arith.constant 0 : index
      %19 = vector.load %arg5[%c0_10, %c0_11] : memref<8x128xf32, #tpu.memory_space<vmem>>, vector<8x128xf32>
      %20 = arith.mulf %18, %18 : vector<16x128xf32>
      %21 = vector.shape_cast %20 : vector<16x128xf32> to vector<2x8x128xf32>
      %cst = arith.constant dense<0.000000e+00> : vector<8x128xf32>
      %22 = vector.multi_reduction <add>, %21, %cst [0] : vector<2x8x128xf32> to vector<8x128xf32>
      %23 = arith.addf %19, %22 : vector<8x128xf32>
      %c0_12 = arith.constant 0 : index
      %c0_13 = arith.constant 0 : index
      %24 = vector.load %arg5[%c0_12, %c0_13] : memref<8x128xf32, #tpu.memory_space<vmem>>, vector<8x128xf32>
      tpu.vector_store %arg5[%c0_12, %c0_13], %23 {strides = array<i32>} : memref<8x128xf32, #tpu.memory_space<vmem>>, vector<8x128xf32>,
    } else {
    }
    %11 = arith.extui %7 : i1 to i32
    %c0_i32_4 = arith.constant 0 : i32
    %12 = arith.cmpi ne, %11, %c0_i32_4 : i32
    scf.if %12 {
      %c16_i32_7 = arith.constant 16 : i32
      %16 = arith.muli %4, %c16_i32_7 : i32
      %17 = tpu.iota {dimensions = array<i32: 0>} : vector<16x128xi32>
      %18 = vector.broadcast %16 : i32 to vector<16x128xi32>
      %19 = arith.addi %18, %17 : vector<16x128xi32>
      %c0 = arith.constant 0 : index
      %c0_8 = arith.constant 0 : index
      %20 = vector.load %arg2[%c0, %c0_8] : memref<16x128xf32, #tpu.memory_space<vmem>>, vector<16x128xf32>
      %c0_9 = arith.constant 0 : index
      %c0_10 = arith.constant 0 : index
      %21 = vector.load %arg3[%c0_9, %c0_10] : memref<16x128xf32, #tpu.memory_space<vmem>>, vector<16x128xf32>
      %22 = arith.subf %20, %21 : vector<16x128xf32>
      %c16_i32_11 = arith.constant 16 : i32
      %23 = vector.broadcast %c16_i32_11 : i32 to vector<16x128xi32>
      %24 = arith.cmpi slt, %19, %23 : vector<16x128xi32>
      %cst = arith.constant 0.000000e+00 : f32
      %25 = vector.broadcast %cst : f32 to vector<16x128xf32>
      %26 = arith.select %24, %22, %25 : vector<16x128xi1>, vector<16x128xf32>
      %c0_12 = arith.constant 0 : index
      %c0_13 = arith.constant 0 : index
      %27 = vector.load %arg5[%c0_12, %c0_13] : memref<8x128xf32, #tpu.memory_space<vmem>>, vector<8x128xf32>
      %28 = arith.mulf %26, %26 : vector<16x128xf32>
      %29 = vector.shape_cast %28 : vector<16x128xf32> to vector<2x8x128xf32>
      %cst_14 = arith.constant dense<0.000000e+00> : vector<8x128xf32>
      %30 = vector.multi_reduction <add>, %29, %cst_14 [0] : vector<2x8x128xf32> to vector<8x128xf32>
      %31 = arith.addf %27, %30 : vector<8x128xf32>
      %c0_15 = arith.constant 0 : index
      %c0_16 = arith.constant 0 : index
      %32 = vector.load %arg5[%c0_15, %c0_16] : memref<8x128xf32, #tpu.memory_space<vmem>>, vector<8x128xf32>
      tpu.vector_store %arg5[%c0_15, %c0_16], %31 {strides = array<i32>} : memref<8x128xf32, #tpu.memory_space<vmem>>, vector<8x128xf32>,
    } else {
    }
    %c0_i32_5 = arith.constant 0 : i32
    %13 = arith.cmpi eq, %arg1, %c0_i32_5 : i32
    %14 = arith.extui %13 : i1 to i32
    %c0_i32_6 = arith.constant 0 : i32
    %15 = arith.cmpi ne, %14, %c0_i32_6 : i32
    scf.if %15 {
      %c0 = arith.constant 0 : index
      %c0_7 = arith.constant 0 : index
      %16 = vector.load %arg5[%c0, %c0_7] : memref<8x128xf32, #tpu.memory_space<vmem>>, vector<8x128xf32>
      %17 = vector.shape_cast %16 : vector<8x128xf32> to vector<1x8x128xf32>
      %cst = arith.constant dense<0.000000e+00> : vector<1xf32>
      %18 = vector.multi_reduction <add>, %17, %cst [1, 2] : vector<1x8x128xf32> to vector<1xf32>
      %19 = vector.shape_cast %18 : vector<1xf32> to vector<1x1x1xf32>
      %20 = vector.extract %19[0, 0, 0] : f32 from vector<1x1x1xf32>
      %c0_8 = arith.constant 0 : index
      %c0_9 = arith.constant 0 : index
      %21 = memref.load %arg4[%c0_8, %c0_9] : memref<1x1xf32, #tpu.memory_space<smem>>
      memref.store %20, %arg4[%c0_8, %c0_9] : memref<1x1xf32, #tpu.memory_space<smem>>
    } else {
    }
    return
  }
  func.func @transform_0(%arg0: i32, %arg1: i32) -> (i32, i32) {
    %c1_i32 = arith.constant 1 : i32
    %0 = arith.muli %arg0, %c1_i32 : i32
    %1 = arith.addi %0, %arg1 : i32
    %c0_i32 = arith.constant 0 : i32
    %2 = arith.minsi %1, %c0_i32 : i32
    %c0_i32_0 = arith.constant 0 : i32
    %c0_i32_1 = arith.constant 0 : i32
    return %2, %c0_i32_0 : i32, i32
  }
  func.func @transform_1(%arg0: i32, %arg1: i32) -> (i32, i32) {
    %c1_i32 = arith.constant 1 : i32
    %0 = arith.muli %arg0, %c1_i32 : i32
    %1 = arith.addi %0, %arg1 : i32
    %c0_i32 = arith.constant 0 : i32
    %2 = arith.minsi %1, %c0_i32 : i32
    %c0_i32_0 = arith.constant 0 : i32
    %c0_i32_1 = arith.constant 0 : i32
    return %2, %c0_i32_0 : i32, i32
  }
  func.func @transform_2(%arg0: i32, %arg1: i32) -> (i32, i32) {
    %c0_i32 = arith.constant 0 : i32
    %c0_i32_0 = arith.constant 0 : i32
    return %arg0, %c0_i32 : i32, i32
  }
}

</mosaic_0001>

<llo_original>
// kernel: tpu_custom_call.1
$region0: #{tpu_custom_call.1}
  #allocation0 [shape = 'u32[]', space=smem, size = 0x4, offset = 0x4, fixed_abs, tag = 'smem constant byte address 0x4 - core index']
  #allocation1 [shape = 'u32[72,128]{1,0:T(1,128)}', space=vmem, size = 0x9000, scoped, tag = 'internal scratch']
  #allocation2 [shape = 'f32[8,128]{1,0:T(8,128)}', space=vmem, size = 0x1000, scoped, tag = 'scratch operand']
  %s0 = inlined_call_operand.hbm [shape: f32[16,128], index: 0, kind: input, shape index: {}]
  %s1 = inlined_call_operand.hbm [shape: f32[16,128], index: 1, kind: input, shape index: {}]
  %s2 = inlined_call_operand.hbm [shape: f32[1,1], index: 2, kind: output, shape index: {}]
  %s3 = sld [smem:[#allocation0]]
  $region42: #{tpu_custom_call.1} parent=0
    _
  %s5 = ssub.s32 1, %s3
  %s6 = scalar_select 0, %s5, %s3
  $region1: #{tpu_custom_call.1} parent=0
    #allocation3 [shape = 'u8[8192]{0}', space=vmem, size = 0x2000, scoped, tag = 'input window, operand 0, single buffered']
    #allocation4 [shape = 's32[1]{0}', space=sflag, size = 0x4, scoped, tag = 'scoped memory for tpu_custom_call.1']
    #allocation5 [shape = 's32[1]{0}', space=sflag, size = 0x4, scoped, tag = 'scoped memory for tpu_custom_call.1']
    #allocation6 [shape = 'u8[8192]{0}', space=vmem, size = 0x2000, scoped, tag = 'input window, operand 1, single buffered']
    #allocation7 [shape = 's32[1]{0}', space=sflag, size = 0x4, scoped, tag = 'scoped memory for tpu_custom_call.1']
    #allocation8 [shape = 'u8[512]{0}', space=smem, size = 0x200, scoped, tag = 'output window, operand 0, single buffered']
    %7 = vsyncpa [#allocation4], 0
    %8 = vsyncpa [#allocation7], 0
    %9 = vsyncpa [#allocation5], 0
    // Predicated region
    $region2: #{tpu_custom_call.1} parent=1 // pred_check
      _
    $region3: #{tpu_custom_call.1} parent=1 // pred_check_branch
      %11 = sbr.rel (0) target = $region5
    $region4: #{tpu_custom_call.1} parent=1 // pred_region
      %s12 = sadd.s32 0, 0
      %p13 = scmp.lt.s32.totalorder %s12, 0
      %s14 = scalar_select %p13, %s12, 0
      %s15 = smul.u32 2, %s14
      %17 = vsyncadd [#allocation4], 0
      %s18 = smul.addr %s15, 8
      %s19 = scalar_lea.hbm %s0, %s18
      %s20 = sshll.u32 %s19, 4
      %s21 = int_to_ptr.hbm [resolvable:$true] %s20
      %s22 = sshll.u32 [#allocation3], 4
      %s23 = int_to_ptr.vmem [resolvable:$true] %s22
      %28 = dma.hbm_to_vmem [thread:$0]  %s21, 256, %s23, [#allocation4], 128, 128, 8
    $region5: #{tpu_custom_call.1} parent=1 // pred_fallthru
      _
    // Predicated region
    $region6: #{tpu_custom_call.1} parent=1 // pred_check
      _
    $region7: #{tpu_custom_call.1} parent=1 // pred_check_branch
      %30 = sbr.rel (0) target = $region9
    $region8: #{tpu_custom_call.1} parent=1 // pred_region
      %s31 = sadd.s32 0, 0
      %p32 = scmp.lt.s32.totalorder %s31, 0
      %s33 = scalar_select %p32, %s31, 0
      %s34 = smul.u32 2, %s33
      %36 = vsyncadd [#allocation7], 0
      %s37 = smul.addr %s34, 8
      %s38 = scalar_lea.hbm %s1, %s37
      %s39 = sshll.u32 %s38, 4
      %s40 = int_to_ptr.hbm [resolvable:$true] %s39
      %s41 = sshll.u32 [#allocation6], 4
      %s42 = int_to_ptr.vmem [resolvable:$true] %s41
      %47 = dma.hbm_to_vmem [thread:$0]  %s40, 256, %s42, [#allocation7], 128, 128, 8
    $region9: #{tpu_custom_call.1} parent=1 // pred_fallthru
      _
    // Predicated region
    $region10: #{tpu_custom_call.1} parent=1 // pred_check
      _
    $region11: #{tpu_custom_call.1} parent=1 // pred_check_branch
      %49 = sbr.rel (0) target = $region13
    $region12: #{tpu_custom_call.1} parent=1 // pred_region
      %51 = dma.done [#allocation4], 256
    $region13: #{tpu_custom_call.1} parent=1 // pred_fallthru
      _
    // Predicated region
    $region14: #{tpu_custom_call.1} parent=1 // pred_check
      _
    $region15: #{tpu_custom_call.1} parent=1 // pred_check_branch
      %53 = sbr.rel (0) target = $region17
    $region16: #{tpu_custom_call.1} parent=1 // pred_region
      %55 = dma.done [#allocation7], 256
    $region17: #{tpu_custom_call.1} parent=1 // pred_fallthru
      _
    %s56 = sadd.s32 0, 0
    %p57 = scmp.lt.s32.totalorder %s56, 0
    %s58 = scalar_select %p57, %s56, 0
    %s59 = smul.u32 2, %s58
    %s60 = sadd.s32 0, 0
    %p61 = scmp.lt.s32.totalorder %s60, 0
    %s62 = scalar_select %p61, %s60, 0
    %s63 = smul.u32 2, %s62
    %p64 = scmp.eq.s32.totalorder 0, 0
    // Predicated region
    $region18: #{tpu_custom_call.1} parent=1 // pred_check
      %p65 = pneg %p64
    $region19: #{tpu_custom_call.1} parent=1 // pred_check_branch
      %67 = sbr.rel (%p65) target = $region21
    $region20: #{tpu_custom_call.1} parent=1 // pred_region
      %68 = vst [vmem:[#allocation2] sm:$0xff] 0.0
    $region21: #{tpu_custom_call.1} parent=1 // pred_fallthru
      _
    %s69 = sadd.s32 0, 0
    %s70 = sadd.s32 %s69, 1
    %s71 = smul.u32 %s70, 16
    %p72 = scmp.gt.s32.totalorder %s71, 16
    %p73 = scmp.le.s32.totalorder %s71, 16
    // Predicated region
    $region22: #{tpu_custom_call.1} parent=1 // pred_check
      %p74 = pneg %p73
    $region23: #{tpu_custom_call.1} parent=1 // pred_check_branch
      %76 = sbr.rel (%p74) target = $region25
    $region24: #{tpu_custom_call.1} parent=1 // pred_region
      %v77 = vld [vmem:[#allocation3] sm:$0xff]
      %v78 = vld [vmem:[#allocation3 + $0x8] sm:$0xff]
      %v79 = vld [vmem:[#allocation6] sm:$0xff]
      %v80 = vld [vmem:[#allocation6 + $0x8] sm:$0xff]
      %v81 = vsub.f32 %v77, %v79
      %v82 = vsub.f32 %v78, %v80
      %v83 = vld [vmem:[#allocation2] sm:$0xff]
      %v84 = vmul.f32 %v81, %v81
      %v85 = vmul.f32 %v82, %v82
      %v86 = vadd.f32 %v84, %v85
      %v87 = vadd.f32 %v83, %v86
      %88 = vst [vmem:[#allocation2] sm:$0xff] %v87
    $region25: #{tpu_custom_call.1} parent=1 // pred_fallthru
      _
    // Predicated region
    $region26: #{tpu_custom_call.1} parent=1 // pred_check
      %p89 = pneg %p72
    $region27: #{tpu_custom_call.1} parent=1 // pred_check_branch
      %91 = sbr.rel (%p89) target = $region29
    $region28: #{tpu_custom_call.1} parent=1 // pred_region
      %s92 = smul.u32 %s69, 16
      %v93 = vlaneseq
      %v94 = vshrl.u32 %v93, 7
      %v95 = vadd.s32 %v94, 8
      %v96 = vstv %s92
      %v97 = vadd.s32 %v96, %v94
      %v98 = vadd.s32 %v96, %v95
      %v99 = vld [vmem:[#allocation3] sm:$0xff]
      %v100 = vld [vmem:[#allocation3 + $0x8] sm:$0xff]
      %v101 = vld [vmem:[#allocation6] sm:$0xff]
      %v102 = vld [vmem:[#allocation6 + $0x8] sm:$0xff]
      %v103 = vsub.f32 %v99, %v101
      %v104 = vsub.f32 %v100, %v102
      %vm105 = vcmp.lt.s32.totalorder %v97, 16
      %vm106 = vcmp.lt.s32.totalorder %v98, 16
      %v107 = vsel %vm105, %v103, 0.0
      %v108 = vsel %vm106, %v104, 0.0
      %v109 = vld [vmem:[#allocation2] sm:$0xff]
      %v110 = vmul.f32 %v107, %v107
      %v111 = vmul.f32 %v108, %v108
      %v112 = vadd.f32 %v110, %v111
      %v113 = vadd.f32 %v109, %v112
      %114 = vst [vmem:[#allocation2] sm:$0xff] %v113
    $region29: #{tpu_custom_call.1} parent=1 // pred_fallthru
      _
    // Predicated region
    $region30: #{tpu_custom_call.1} parent=1 // pred_check
      %p115 = pneg %p64
    $region31: #{tpu_custom_call.1} parent=1 // pred_check_branch
      %117 = sbr.rel (%p115) target = $region33
    $region32: #{tpu_custom_call.1} parent=1 // pred_region
      %v118 = vld [vmem:[#allocation2] sm:$0xff]
      %119 = vadd.xlane.f32.xlu0 %v118
      %v120 = vpop.xlane.xlu0 %119
      %v121 = vrot.slane %v120, 4
      %v122 = vadd.f32 %v120, %v121
      %v123 = vrot.slane %v122, 2
      %v124 = vadd.f32 %v122, %v123
      %v125 = vrot.slane %v124, 1
      %v126 = vadd.f32 %v124, %v125
      %s127 = vtos %v126
      %s128 = scalar_lea.smem [#allocation8], 0
      %129 = sst [smem:[%s128]] %s127
    $region33: #{tpu_custom_call.1} parent=1 // pred_fallthru
      _
    // Predicated region
    $region34: #{tpu_custom_call.1} parent=1 // pred_check
      _
    $region35: #{tpu_custom_call.1} parent=1 // pred_check_branch
      %131 = sbr.rel (0) target = $region37
    $region36: #{tpu_custom_call.1} parent=1 // pred_region
      %133 = vsyncadd [#allocation5], 0
      %s135 = sshll.u32 %s2, 4
      %s136 = int_to_ptr.hbm [resolvable:$true] %s135
      %138 = dma.smem_to_hbm [#allocation8], 16, %s136, [#allocation5]
    $region37: #{tpu_custom_call.1} parent=1 // pred_fallthru
      _
    // Predicated region
    $region38: #{tpu_custom_call.1} parent=1 // pred_check
      _
    $region39: #{tpu_custom_call.1} parent=1 // pred_check_branch
      %140 = sbr.rel (0) target = $region41
    $region40: #{tpu_custom_call.1} parent=1 // pred_region
      %142 = dma.done [#allocation5], 16
    $region41: #{tpu_custom_call.1} parent=1 // pred_fallthru
      _
    %143 = sfence
    %144 = vsyncpa [#allocation4], 1
    %145 = vsyncpa [#allocation7], 1
    %146 = vsyncpa [#allocation5], 1

</llo_original>
